<compile_context>
chip_gen: v7x
topology: tpu7x:2x2x1
jax: 0.10.0
libtpu: 0.0.40
codegen_flags: <defaults>
</compile_context>

<pallas_src>
import functools

import jax
import jax.numpy as jnp
import numpy as np
from jax.experimental import pallas as pl
from jax.experimental.pallas import tpu as pltpu

CHANNEL_DIVISIBLE = 8


def make_divisible(v, divisor=CHANNEL_DIVISIBLE, min_val=None):
    if min_val is None:
        min_val = divisor
    new_v = max(min_val, int(v + divisor / 2) // divisor * divisor)
    if new_v < 0.9 * v:
        new_v += divisor
    return new_v


def get_same_padding(kernel_size):
    return kernel_size // 2


def _round_up(x, m):
    return (x + m - 1) // m * m


def _h_swish(x):
    # h_swish(x) = x * relu6(x + 3) / 6
    return x * jnp.clip(x + 3.0, 0.0, 6.0) * (1.0 / 6.0)


def _h_swish_unscaled(x):
    # 6 * h_swish(x); the 1/6 is folded into the *following* conv weights.
    return x * jnp.clip(x + 3.0, 0.0, 6.0)


def _choose_tb(batch):
    """Batch elements per grid step: big enough to amortize per-step overhead,
    but keep >= 2 grid steps so both v7x TensorCores get work."""
    if batch <= 2:
        return 1
    for tb in (8, 4, 2):
        if batch % tb == 0 and batch // tb >= 2:
            return tb
    return 1


def mbconv_kernel(x_ref, w1_ref, b1_ref, wdw_ref, bdw_ref, w2_ref, b2_ref,
                  o_ref, hp_ref, *, kernel_size, stride, stage_off):
    # x_ref : (TB, L, Cin)        bf16
    # w1_ref: (Cin, Cmid)         bf16   b1_ref : (1, Cmid)  f32
    # wdw_ref:(K, Cmid)           f32    bdw_ref: (1, Cmid)  f32   (wdw pre-scaled 1/6)
    # w2_ref: (Cmid, Cout)        bf16   b2_ref : (1, Cout)  f32   (w2 pre-scaled 1/6)
    # o_ref : (TB, l_out, Cout)   f32
    # hp_ref: (TB, Lp_pad, Cmid)  f32 VMEM scratch (zero-padded depthwise input,
    #                             activations staged at sublane-aligned stage_off)
    tb, l_in, cin = x_ref.shape
    l_out = o_ref.shape[1]
    cmid = w1_ref.shape[1]
    pad = kernel_size // 2
    lp = hp_ref.shape[1]

    # --- 1) inverted bottleneck: 1x1 conv on the MXU, batch+length flattened ---
    x2d = x_ref[...].reshape(tb * l_in, cin)                      # bf16
    z1 = jnp.dot(x2d, w1_ref[...], preferred_element_type=jnp.float32) + b1_ref[...]
    g1 = _h_swish_unscaled(z1)                                    # (TB*L, Cmid) f32

    # --- 2) depthwise conv k, stride s, 'same' padding --------------------------
    # Zero-padded stride-1 activations live in a VMEM scratch at a sublane-aligned
    # offset; only the pad regions are zeroed (they are never overwritten). Each
    # tap is a static-offset *strided* ref slice landing directly on the strided
    # output positions -- no stride-1 intermediate, no selection matmul.
    if stage_off > 0:
        hp_ref[:, :stage_off, :] = jnp.zeros((tb, stage_off, cmid), jnp.float32)
    tail = lp - (stage_off + l_in)
    if tail > 0:
        hp_ref[:, stage_off + l_in:, :] = jnp.zeros((tb, tail, cmid), jnp.float32)
    hp_ref[:, stage_off:stage_off + l_in, :] = g1.reshape(tb, l_in, cmid)

    w_dw = wdw_ref[...]                                           # hoisted (K, Cmid)
    acc = jnp.broadcast_to(bdw_ref[...].reshape(1, 1, cmid),
                           (tb, l_out, cmid)).astype(jnp.float32)
    base = stage_off - pad                                        # >= 0 by construction
    for k in range(kernel_size):                                  # static unroll, K small
        tap = hp_ref[:, pl.ds(base + k, l_out, stride=stride), :]  # (TB, l_out, Cmid)
        acc = acc + tap * w_dw[k]
    g2 = _h_swish_unscaled(acc)                                   # (TB, l_out, Cmid) f32

    # --- 3) point linear: 1x1 conv on the MXU + folded BN (no activation) -------
    g2b = g2.reshape(tb * l_out, cmid).astype(w2_ref.dtype)
    out = jnp.dot(g2b, w2_ref[...], preferred_element_type=jnp.float32) + b2_ref[...]
    o_ref[...] = out.reshape(tb, l_out, -1).astype(o_ref.dtype)


def mbconv_forward(x_ncl, params, *, kernel_size, stride):
    """x_ncl: (B, Cin, L) float32 -> (B, Cout, L_out) float32."""
    w1, b1, wdw, bdw, w2, b2 = params
    B, cin, L = x_ncl.shape
    cmid = w1.shape[1]
    cout = w2.shape[1]
    pad = get_same_padding(kernel_size)
    l_out = (L + 2 * pad - kernel_size) // stride + 1

    # Sublane-aligned staging offset for the depthwise scratch; covers max tap
    # index stage_off - pad + (K-1) + stride*(l_out-1) < stage_off + L + pad.
    stage_off = _round_up(pad, 8) if pad > 0 else 0
    lp_pad = _round_up(stage_off + L + pad, 8)

    tb = _choose_tb(B)
    grid = (B // tb,)

    # channels-last; bf16 on the MXU path (f32 accumulate), f32 on the VPU path.
    x = jnp.transpose(x_ncl, (0, 2, 1)).astype(jnp.bfloat16)      # (B, L, Cin)
    w1b = w1.astype(jnp.bfloat16)
    # fold the two h_swish 1/6 scales into the following per-channel weights
    wdw6 = (wdw * (1.0 / 6.0)).astype(jnp.float32)
    w2b = (w2 * (1.0 / 6.0)).astype(jnp.bfloat16)

    kern = functools.partial(mbconv_kernel, kernel_size=kernel_size,
                             stride=stride, stage_off=stage_off)
    out = pl.pallas_call(
        kern,
        out_shape=jax.ShapeDtypeStruct((B, l_out, cout), jnp.float32),
        grid_spec=pltpu.PrefetchScalarGridSpec(
            num_scalar_prefetch=0,
            grid=grid,
            in_specs=[
                pl.BlockSpec((tb, L, cin), lambda b: (b, 0, 0)),
                pl.BlockSpec((cin, cmid), lambda b: (0, 0)),
                pl.BlockSpec((1, cmid), lambda b: (0, 0)),
                pl.BlockSpec((kernel_size, cmid), lambda b: (0, 0)),
                pl.BlockSpec((1, cmid), lambda b: (0, 0)),
                pl.BlockSpec((cmid, cout), lambda b: (0, 0)),
                pl.BlockSpec((1, cout), lambda b: (0, 0)),
            ],
            out_specs=pl.BlockSpec((tb, l_out, cout), lambda b: (b, 0, 0)),
            scratch_shapes=[pltpu.VMEM((tb, lp_pad, cmid), jnp.float32)],
        ),
        compiler_params=pltpu.CompilerParams(
            dimension_semantics=("parallel",),
            vmem_limit_bytes=32 * 1024 * 1024,
        ),
    )(x, w1b, b1, wdw6, bdw, w2b, b2)
    return jnp.transpose(out, (0, 2, 1))


def init_params(key, in_channels, out_channels, expand_ratio, kernel_size, eps=1e-5):
    """Deterministic synthetic params; BN (eval mode) folded into the convs."""
    cmid = make_divisible(round(in_channels * expand_ratio), CHANNEL_DIVISIBLE)
    ks = jax.random.split(key, 18)

    # PyTorch shapes: conv1 (Cmid, Cin, 1), dw (Cmid, 1, K), conv2 (Cout, Cmid, 1)
    w1 = 0.2 * jax.random.normal(ks[0], (cmid, in_channels), jnp.float32)
    cb1 = 0.1 * jax.random.normal(ks[1], (cmid,), jnp.float32)
    g1 = 1.0 + 0.1 * jax.random.normal(ks[2], (cmid,), jnp.float32)
    be1 = 0.1 * jax.random.normal(ks[3], (cmid,), jnp.float32)
    m1 = 0.05 * jax.random.normal(ks[4], (cmid,), jnp.float32)
    v1 = jax.random.uniform(ks[5], (cmid,), jnp.float32, 0.5, 1.5)

    wdw = 0.2 * jax.random.normal(ks[6], (cmid, kernel_size), jnp.float32)
    cbd = 0.1 * jax.random.normal(ks[7], (cmid,), jnp.float32)
    gd = 1.0 + 0.1 * jax.random.normal(ks[8], (cmid,), jnp.float32)
    bed = 0.1 * jax.random.normal(ks[9], (cmid,), jnp.float32)
    md = 0.05 * jax.random.normal(ks[10], (cmid,), jnp.float32)
    vd = jax.random.uniform(ks[11], (cmid,), jnp.float32, 0.5, 1.5)

    w2 = 0.2 * jax.random.normal(ks[12], (out_channels, cmid), jnp.float32)
    cb2 = 0.1 * jax.random.normal(ks[13], (out_channels,), jnp.float32)
    g2 = 1.0 + 0.1 * jax.random.normal(ks[14], (out_channels,), jnp.float32)
    be2 = 0.1 * jax.random.normal(ks[15], (out_channels,), jnp.float32)
    m2 = 0.05 * jax.random.normal(ks[16], (out_channels,), jnp.float32)
    v2 = jax.random.uniform(ks[17], (out_channels,), jnp.float32, 0.5, 1.5)

    s1 = g1 / jnp.sqrt(v1 + eps)
    w1f = (w1 * s1[:, None]).T                      # (Cin, Cmid)
    b1f = ((cb1 - m1) * s1 + be1)[None, :]          # (1, Cmid)

    sd = gd / jnp.sqrt(vd + eps)
    wdwf = (wdw * sd[:, None]).T                    # (K, Cmid)
    bdwf = ((cbd - md) * sd + bed)[None, :]         # (1, Cmid)

    s2 = g2 / jnp.sqrt(v2 + eps)
    w2f = (w2 * s2[:, None]).T                      # (Cmid, Cout)
    b2f = ((cb2 - m2) * s2 + be2)[None, :]          # (1, Cout)

    return (w1f, b1f, wdwf, bdwf, w2f, b2f)


def reference_forward(x_ncl, params, *, kernel_size, stride):
    """Pure-JAX f32 reference of the same (BN-folded) forward pass."""
    w1, b1, wdw, bdw, w2, b2 = params
    B, cin, L = x_ncl.shape
    x = jnp.transpose(x_ncl, (0, 2, 1)).astype(jnp.float32)     # (B, L, Cin)
    h = _h_swish(x @ w1 + b1)                                   # (B, L, Cmid)
    pad = kernel_size // 2
    hp = jnp.pad(h, ((0, 0), (pad, pad), (0, 0)))
    l_out = (L + 2 * pad - kernel_size) // stride + 1
    fc = jnp.zeros((B, l_out, h.shape[-1]), jnp.float32)
    for k in range(kernel_size):
        sl = hp[:, k:k + stride * (l_out - 1) + 1:stride, :]
        fc = fc + sl * wdw[k][None, None, :]
    fc = _h_swish(fc + bdw[None, :, :])
    out = fc @ w2 + b2[None, :, :]
    return jnp.transpose(out, (0, 2, 1))


if __name__ == "__main__":
    in_channels, out_channels = 4, 8
    expand_ratio, kernel_size, stride = 4, 7, 2
    B, L = 2, 16

    key = jax.random.PRNGKey(0)
    kx, kp = jax.random.split(key)
    x = jax.random.normal(kx, (B, in_channels, L), jnp.float32)
    params = init_params(kp, in_channels, out_channels, expand_ratio, kernel_size)

    out = mbconv_forward(x, params, kernel_size=kernel_size, stride=stride)
    out = jax.block_until_ready(out)

    pad = get_same_padding(kernel_size)
    l_out = (L + 2 * pad - kernel_size) // stride + 1
    assert out.shape == (B, out_channels, l_out), out.shape

    ref = reference_forward(x, params, kernel_size=kernel_size, stride=stride)
    # kernel runs the MXU path in bf16 (f32 accumulate); compare to f32 reference
    np.testing.assert_allclose(np.asarray(out), np.asarray(ref), atol=2e-2, rtol=2e-2)

    print("KERNEL_OK")
</pallas_src>

<mosaic_0001>
module attributes {stable_mosaic.version = 11 : i64} {
  func.func @mbconv_kernel(%arg0: i32, %arg1: memref<1x16x4xbf16, #tpu.memory_space<vmem>>, %arg2: memref<4x16xbf16, #tpu.memory_space<vmem>>, %arg3: memref<1x16xf32, #tpu.memory_space<vmem>>, %arg4: memref<7x16xf32, #tpu.memory_space<vmem>>, %arg5: memref<1x16xf32, #tpu.memory_space<vmem>>, %arg6: memref<16x8xbf16, #tpu.memory_space<vmem>>, %arg7: memref<1x8xf32, #tpu.memory_space<vmem>>, %arg8: memref<1x8x8xf32, #tpu.memory_space<vmem>>, %arg9: memref<1x32x16xf32, #tpu.memory_space<vmem>>) attributes {dimension_semantics = [#tpu.dimension_semantics<parallel>], iteration_bounds = array<i64: 2>, scalar_prefetch = 0 : i64, scratch_operands = 1 : i64, tpu.core_type = #tpu.core_type<tc>, window_params = [{transform_indices = @transform_0, window_bounds = array<i64: 1, 16, 4>}, {pipeline_mode = #tpu.pipeline_mode<synchronous>, transform_indices = @transform_1, window_bounds = array<i64: 4, 16>}, {pipeline_mode = #tpu.pipeline_mode<synchronous>, transform_indices = @transform_2, window_bounds = array<i64: 1, 16>}, {pipeline_mode = #tpu.pipeline_mode<synchronous>, transform_indices = @transform_3, window_bounds = array<i64: 7, 16>}, {pipeline_mode = #tpu.pipeline_mode<synchronous>, transform_indices = @transform_4, window_bounds = array<i64: 1, 16>}, {pipeline_mode = #tpu.pipeline_mode<synchronous>, transform_indices = @transform_5, window_bounds = array<i64: 16, 8>}, {pipeline_mode = #tpu.pipeline_mode<synchronous>, transform_indices = @transform_6, window_bounds = array<i64: 1, 8>}, {transform_indices = @transform_7, window_bounds = array<i64: 1, 8, 8>}]} {
    %c0 = arith.constant 0 : index
    %c0_0 = arith.constant 0 : index
    %c0_1 = arith.constant 0 : index
    %0 = vector.load %arg1[%c0, %c0_0, %c0_1] : memref<1x16x4xbf16, #tpu.memory_space<vmem>>, vector<1x16x4xbf16>
    %1 = vector.shape_cast %0 : vector<1x16x4xbf16> to vector<16x4xbf16>
    %c0_2 = arith.constant 0 : index
    %c0_3 = arith.constant 0 : index
    %2 = vector.load %arg2[%c0_2, %c0_3] : memref<4x16xbf16, #tpu.memory_space<vmem>>, vector<4x16xbf16>
    %cst = arith.constant dense<0.000000e+00> : vector<16x16xf32>
    %3 = tpu.matmul %1, %2, %cst {dimension_numbers = #tpu.dot_dimension_numbers<[1], [0], [0], [1], [0, 0, 1, 1], [], []>} : vector<16x4xbf16>, vector<4x16xbf16>, vector<16x16xf32> -> vector<16x16xf32>
    %c0_4 = arith.constant 0 : index
    %c0_5 = arith.constant 0 : index
    %4 = vector.load %arg3[%c0_4, %c0_5] : memref<1x16xf32, #tpu.memory_space<vmem>>, vector<1x16xf32>
    %5 = vector.broadcast %4 : vector<1x16xf32> to vector<16x16xf32>
    %6 = arith.addf %3, %5 : vector<16x16xf32>
    %cst_6 = arith.constant 3.000000e+00 : f32
    %7 = vector.broadcast %cst_6 : f32 to vector<16x16xf32>
    %8 = arith.addf %6, %7 : vector<16x16xf32>
    %cst_7 = arith.constant 0.000000e+00 : f32
    %cst_8 = arith.constant 6.000000e+00 : f32
    %9 = vector.broadcast %cst_7 : f32 to vector<16x16xf32>
    %10 = arith.maximumf %9, %8 : vector<16x16xf32>
    %11 = vector.broadcast %cst_8 : f32 to vector<16x16xf32>
    %12 = arith.minimumf %11, %10 : vector<16x16xf32>
    %13 = arith.mulf %6, %12 : vector<16x16xf32>
    %cst_9 = arith.constant 0.000000e+00 : f32
    %14 = vector.broadcast %cst_9 : f32 to vector<1x8x16xf32>
    %c0_10 = arith.constant 0 : index
    %c0_11 = arith.constant 0 : index
    %c0_12 = arith.constant 0 : index
    %15 = vector.load %arg9[%c0_10, %c0_11, %c0_12] : memref<1x32x16xf32, #tpu.memory_space<vmem>>, vector<1x8x16xf32>
    tpu.vector_store %arg9[%c0_10, %c0_11, %c0_12], %14 {strides = array<i32>} : memref<1x32x16xf32, #tpu.memory_space<vmem>>, vector<1x8x16xf32>,
    %cst_13 = arith.constant 0.000000e+00 : f32
    %16 = vector.broadcast %cst_13 : f32 to vector<1x8x16xf32>
    %c0_14 = arith.constant 0 : index
    %c24 = arith.constant 24 : index
    %c0_15 = arith.constant 0 : index
    %17 = vector.load %arg9[%c0_14, %c24, %c0_15] : memref<1x32x16xf32, #tpu.memory_space<vmem>>, vector<1x8x16xf32>
    tpu.vector_store %arg9[%c0_14, %c24, %c0_15], %16 {strides = array<i32>} : memref<1x32x16xf32, #tpu.memory_space<vmem>>, vector<1x8x16xf32>,
    %18 = vector.shape_cast %13 : vector<16x16xf32> to vector<1x16x16xf32>
    %c0_16 = arith.constant 0 : index
    %c8 = arith.constant 8 : index
    %c0_17 = arith.constant 0 : index
    %19 = vector.load %arg9[%c0_16, %c8, %c0_17] : memref<1x32x16xf32, #tpu.memory_space<vmem>>, vector<1x16x16xf32>
    tpu.vector_store %arg9[%c0_16, %c8, %c0_17], %18 {strides = array<i32>} : memref<1x32x16xf32, #tpu.memory_space<vmem>>, vector<1x16x16xf32>,
    %c0_18 = arith.constant 0 : index
    %c0_19 = arith.constant 0 : index
    %20 = vector.load %arg4[%c0_18, %c0_19] : memref<7x16xf32, #tpu.memory_space<vmem>>, vector<7x16xf32>
    %c0_20 = arith.constant 0 : index
    %c0_21 = arith.constant 0 : index
    %21 = vector.load %arg5[%c0_20, %c0_21] : memref<1x16xf32, #tpu.memory_space<vmem>>, vector<1x16xf32>
    %22 = vector.shape_cast %21 : vector<1x16xf32> to vector<1x1x16xf32>
    %23 = vector.shape_cast %22 : vector<1x1x16xf32> to vector<1x1x16xf32>
    %24 = vector.broadcast %23 : vector<1x1x16xf32> to vector<1x8x16xf32>
    %c0_22 = arith.constant 0 : index
    %c5 = arith.constant 5 : index
    %c0_23 = arith.constant 0 : index
    %25 = tpu.strided_load %arg9[%c0_22, %c5, %c0_23] {strides = array<i32: 1, 2, 1>} : memref<1x32x16xf32, #tpu.memory_space<vmem>>, vector<1x8x16xf32>
    %26 = vector.extract_strided_slice %20 {offsets = [0, 0], sizes = [1, 16], strides = [1, 1]} : vector<7x16xf32> to vector<1x16xf32>
    %27 = vector.shape_cast %26 : vector<1x16xf32> to vector<16xf32>
    %28 = vector.shape_cast %27 : vector<16xf32> to vector<1x1x16xf32>
    %29 = vector.broadcast %28 : vector<1x1x16xf32> to vector<1x8x16xf32>
    %30 = arith.mulf %25, %29 : vector<1x8x16xf32>
    %31 = arith.addf %24, %30 : vector<1x8x16xf32>
    %c0_24 = arith.constant 0 : index
    %c6 = arith.constant 6 : index
    %c0_25 = arith.constant 0 : index
    %32 = tpu.strided_load %arg9[%c0_24, %c6, %c0_25] {strides = array<i32: 1, 2, 1>} : memref<1x32x16xf32, #tpu.memory_space<vmem>>, vector<1x8x16xf32>
    %33 = vector.extract_strided_slice %20 {offsets = [1, 0], sizes = [1, 16], strides = [1, 1]} : vector<7x16xf32> to vector<1x16xf32>
    %34 = vector.shape_cast %33 : vector<1x16xf32> to vector<16xf32>
    %35 = vector.shape_cast %34 : vector<16xf32> to vector<1x1x16xf32>
    %36 = vector.broadcast %35 : vector<1x1x16xf32> to vector<1x8x16xf32>
    %37 = arith.mulf %32, %36 : vector<1x8x16xf32>
    %38 = arith.addf %31, %37 : vector<1x8x16xf32>
    %c0_26 = arith.constant 0 : index
    %c7 = arith.constant 7 : index
    %c0_27 = arith.constant 0 : index
    %39 = tpu.strided_load %arg9[%c0_26, %c7, %c0_27] {strides = array<i32: 1, 2, 1>} : memref<1x32x16xf32, #tpu.memory_space<vmem>>, vector<1x8x16xf32>
    %40 = vector.extract_strided_slice %20 {offsets = [2, 0], sizes = [1, 16], strides = [1, 1]} : vector<7x16xf32> to vector<1x16xf32>
    %41 = vector.shape_cast %40 : vector<1x16xf32> to vector<16xf32>
    %42 = vector.shape_cast %41 : vector<16xf32> to vector<1x1x16xf32>
    %43 = vector.broadcast %42 : vector<1x1x16xf32> to vector<1x8x16xf32>
    %44 = arith.mulf %39, %43 : vector<1x8x16xf32>
    %45 = arith.addf %38, %44 : vector<1x8x16xf32>
    %c0_28 = arith.constant 0 : index
    %c8_29 = arith.constant 8 : index
    %c0_30 = arith.constant 0 : index
    %46 = tpu.strided_load %arg9[%c0_28, %c8_29, %c0_30] {strides = array<i32: 1, 2, 1>} : memref<1x32x16xf32, #tpu.memory_space<vmem>>, vector<1x8x16xf32>
    %47 = vector.extract_strided_slice %20 {offsets = [3, 0], sizes = [1, 16], strides = [1, 1]} : vector<7x16xf32> to vector<1x16xf32>
    %48 = vector.shape_cast %47 : vector<1x16xf32> to vector<16xf32>
    %49 = vector.shape_cast %48 : vector<16xf32> to vector<1x1x16xf32>
    %50 = vector.broadcast %49 : vector<1x1x16xf32> to vector<1x8x16xf32>
    %51 = arith.mulf %46, %50 : vector<1x8x16xf32>
    %52 = arith.addf %45, %51 : vector<1x8x16xf32>
    %c0_31 = arith.constant 0 : index
    %c9 = arith.constant 9 : index
    %c0_32 = arith.constant 0 : index
    %53 = tpu.strided_load %arg9[%c0_31, %c9, %c0_32] {strides = array<i32: 1, 2, 1>} : memref<1x32x16xf32, #tpu.memory_space<vmem>>, vector<1x8x16xf32>
    %54 = vector.extract_strided_slice %20 {offsets = [4, 0], sizes = [1, 16], strides = [1, 1]} : vector<7x16xf32> to vector<1x16xf32>
    %55 = vector.shape_cast %54 : vector<1x16xf32> to vector<16xf32>
    %56 = vector.shape_cast %55 : vector<16xf32> to vector<1x1x16xf32>
    %57 = vector.broadcast %56 : vector<1x1x16xf32> to vector<1x8x16xf32>
    %58 = arith.mulf %53, %57 : vector<1x8x16xf32>
    %59 = arith.addf %52, %58 : vector<1x8x16xf32>
    %c0_33 = arith.constant 0 : index
    %c10 = arith.constant 10 : index
    %c0_34 = arith.constant 0 : index
    %60 = tpu.strided_load %arg9[%c0_33, %c10, %c0_34] {strides = array<i32: 1, 2, 1>} : memref<1x32x16xf32, #tpu.memory_space<vmem>>, vector<1x8x16xf32>
    %61 = vector.extract_strided_slice %20 {offsets = [5, 0], sizes = [1, 16], strides = [1, 1]} : vector<7x16xf32> to vector<1x16xf32>
    %62 = vector.shape_cast %61 : vector<1x16xf32> to vector<16xf32>
    %63 = vector.shape_cast %62 : vector<16xf32> to vector<1x1x16xf32>
    %64 = vector.broadcast %63 : vector<1x1x16xf32> to vector<1x8x16xf32>
    %65 = arith.mulf %60, %64 : vector<1x8x16xf32>
    %66 = arith.addf %59, %65 : vector<1x8x16xf32>
    %c0_35 = arith.constant 0 : index
    %c11 = arith.constant 11 : index
    %c0_36 = arith.constant 0 : index
    %67 = tpu.strided_load %arg9[%c0_35, %c11, %c0_36] {strides = array<i32: 1, 2, 1>} : memref<1x32x16xf32, #tpu.memory_space<vmem>>, vector<1x8x16xf32>
    %68 = vector.extract_strided_slice %20 {offsets = [6, 0], sizes = [1, 16], strides = [1, 1]} : vector<7x16xf32> to vector<1x16xf32>
    %69 = vector.shape_cast %68 : vector<1x16xf32> to vector<16xf32>
    %70 = vector.shape_cast %69 : vector<16xf32> to vector<1x1x16xf32>
    %71 = vector.broadcast %70 : vector<1x1x16xf32> to vector<1x8x16xf32>
    %72 = arith.mulf %67, %71 : vector<1x8x16xf32>
    %73 = arith.addf %66, %72 : vector<1x8x16xf32>
    %cst_37 = arith.constant 3.000000e+00 : f32
    %74 = vector.broadcast %cst_37 : f32 to vector<1x8x16xf32>
    %75 = arith.addf %73, %74 : vector<1x8x16xf32>
    %cst_38 = arith.constant 0.000000e+00 : f32
    %cst_39 = arith.constant 6.000000e+00 : f32
    %76 = vector.broadcast %cst_38 : f32 to vector<1x8x16xf32>
    %77 = arith.maximumf %76, %75 : vector<1x8x16xf32>
    %78 = vector.broadcast %cst_39 : f32 to vector<1x8x16xf32>
    %79 = arith.minimumf %78, %77 : vector<1x8x16xf32>
    %80 = arith.mulf %73, %79 : vector<1x8x16xf32>
    %81 = vector.shape_cast %80 : vector<1x8x16xf32> to vector<8x16xf32>
    %82 = arith.truncf %81 : vector<8x16xf32> to vector<8x16xbf16>
    %c0_40 = arith.constant 0 : index
    %c0_41 = arith.constant 0 : index
    %83 = vector.load %arg6[%c0_40, %c0_41] : memref<16x8xbf16, #tpu.memory_space<vmem>>, vector<16x8xbf16>
    %cst_42 = arith.constant dense<0.000000e+00> : vector<8x8xf32>
    %84 = tpu.matmul %82, %83, %cst_42 {dimension_numbers = #tpu.dot_dimension_numbers<[1], [0], [0], [1], [0, 0, 1, 1], [], []>} : vector<8x16xbf16>, vector<16x8xbf16>, vector<8x8xf32> -> vector<8x8xf32>
    %c0_43 = arith.constant 0 : index
    %c0_44 = arith.constant 0 : index
    %85 = vector.load %arg7[%c0_43, %c0_44] : memref<1x8xf32, #tpu.memory_space<vmem>>, vector<1x8xf32>
    %86 = vector.broadcast %85 : vector<1x8xf32> to vector<8x8xf32>
    %87 = arith.addf %84, %86 : vector<8x8xf32>
    %88 = vector.shape_cast %87 : vector<8x8xf32> to vector<1x8x8xf32>
    %c0_45 = arith.constant 0 : index
    %c0_46 = arith.constant 0 : index
    %c0_47 = arith.constant 0 : index
    %89 = vector.load %arg8[%c0_45, %c0_46, %c0_47] : memref<1x8x8xf32, #tpu.memory_space<vmem>>, vector<1x8x8xf32>
    tpu.vector_store %arg8[%c0_45, %c0_46, %c0_47], %88 {strides = array<i32>} : memref<1x8x8xf32, #tpu.memory_space<vmem>>, vector<1x8x8xf32>,
    return
  }
  func.func @transform_0(%arg0: i32) -> (i32, i32, i32) {
    %c0_i32 = arith.constant 0 : i32
    %c0_i32_0 = arith.constant 0 : i32
    %c0_i32_1 = arith.constant 0 : i32
    return %arg0, %c0_i32, %c0_i32_0 : i32, i32, i32
  }
  func.func @transform_1(%arg0: i32) -> (i32, i32) {
    %c0_i32 = arith.constant 0 : i32
    %c0_i32_0 = arith.constant 0 : i32
    %c0_i32_1 = arith.constant 0 : i32
    return %c0_i32, %c0_i32_0 : i32, i32
  }
  func.func @transform_2(%arg0: i32) -> (i32, i32) {
    %c0_i32 = arith.constant 0 : i32
    %c0_i32_0 = arith.constant 0 : i32
    %c0_i32_1 = arith.constant 0 : i32
    return %c0_i32, %c0_i32_0 : i32, i32
  }
  func.func @transform_3(%arg0: i32) -> (i32, i32) {
    %c0_i32 = arith.constant 0 : i32
    %c0_i32_0 = arith.constant 0 : i32
    %c0_i32_1 = arith.constant 0 : i32
    return %c0_i32, %c0_i32_0 : i32, i32
  }
  func.func @transform_4(%arg0: i32) -> (i32, i32) {
    %c0_i32 = arith.constant 0 : i32
    %c0_i32_0 = arith.constant 0 : i32
    %c0_i32_1 = arith.constant 0 : i32
    return %c0_i32, %c0_i32_0 : i32, i32
  }
  func.func @transform_5(%arg0: i32) -> (i32, i32) {
    %c0_i32 = arith.constant 0 : i32
    %c0_i32_0 = arith.constant 0 : i32
    %c0_i32_1 = arith.constant 0 : i32
    return %c0_i32, %c0_i32_0 : i32, i32
  }
  func.func @transform_6(%arg0: i32) -> (i32, i32) {
    %c0_i32 = arith.constant 0 : i32
    %c0_i32_0 = arith.constant 0 : i32
    %c0_i32_1 = arith.constant 0 : i32
    return %c0_i32, %c0_i32_0 : i32, i32
  }
  func.func @transform_7(%arg0: i32) -> (i32, i32, i32) {
    %c0_i32 = arith.constant 0 : i32
    %c0_i32_0 = arith.constant 0 : i32
    %c0_i32_1 = arith.constant 0 : i32
    return %arg0, %c0_i32, %c0_i32_0 : i32, i32, i32
  }
}

</mosaic_0001>

<llo_original>
// kernel: tpu_custom_call.1
$region0: #{tpu_custom_call.1}
  #allocation0 [shape = 'u32[]', space=smem, size = 0x4, offset = 0x4, fixed_abs, tag = 'smem constant byte address 0x4 - core index']
  #allocation1 [shape = 'u32[144,128]{1,0:T(1,128)}', space=vmem, size = 0x12000, scoped, tag = 'internal scratch']
  #allocation2 [shape = 'f32[1,32,16]{2,1,0:T(8,128)}', space=vmem, size = 0x4000, scoped, tag = 'scratch operand']
  %s0 = inlined_call_operand.vmem [shape: bf16[2,16,4], index: 0, kind: input, shape index: {}]
  %s1 = inlined_call_operand.vmem [shape: bf16[4,16], index: 1, kind: input, shape index: {}]
  %s2 = inlined_call_operand.vmem [shape: f32[1,16], index: 2, kind: input, shape index: {}]
  %s3 = inlined_call_operand.vmem [shape: f32[7,16], index: 3, kind: input, shape index: {}]
  %s4 = inlined_call_operand.vmem [shape: f32[1,16], index: 4, kind: input, shape index: {}]
  %s5 = inlined_call_operand.vmem [shape: bf16[16,8], index: 5, kind: input, shape index: {}]
  %s6 = inlined_call_operand.vmem [shape: f32[1,8], index: 6, kind: input, shape index: {}]
  %s7 = inlined_call_operand.hbm [shape: f32[2,8,8], index: 7, kind: output, shape index: {}]
  %s8 = sld [smem:[#allocation0]]
  $region61: #{tpu_custom_call.1} parent=0
    _
  %s10 = ssub.s32 1, %s8
  %s11 = scalar_select 0, %s10, %s8
  $region1: #{tpu_custom_call.1} parent=0
    #allocation3 [shape = 'u8[8192]{0}', space=vmem, size = 0x2000, scoped, tag = 'output window, operand 0']
    #allocation4 [shape = 's32[2]{0}', space=sflag, size = 0x8, scoped, tag = 'scoped memory for tpu_custom_call.1']
    %12 = vsyncpa [#allocation4], 0
    %s13 = scalar_lea.sflag [#allocation4], 1
    %14 = vsyncpa %s13, 0
    loop: start=0, step=1, limit=4
    $region2: #{tpu_custom_call.1} parent=1 // loop_pre_header
      _
    $region3: #{tpu_custom_call.1} parent=1 // loop_header
      %s16 = sphi 0, %s20
      %p17 = scmp.ge.s32.totalorder %s16, 4
      %s26 = sphi 0, %s28
      %s29 = sphi 0, %s26
      %s30 = sphi 0, %s29
      %s46 = sphi 0, %s30
      %s50 = sphi 0, %s50
      %s52 = sphi 0, %s50
      %s53 = sphi 0, %s52
      %s67 = sphi 0, %s53
      %s71 = sphi 0, %s71
      %s73 = sphi 0, %s71
      %s74 = sphi 0, %s73
      %s88 = sphi 0, %s74
      %s92 = sphi 0, %s92
      %s94 = sphi 0, %s92
      %s95 = sphi 0, %s94
      %s109 = sphi 0, %s95
      %s113 = sphi 0, %s113
      %s115 = sphi 0, %s113
      %s116 = sphi 0, %s115
      %s130 = sphi 0, %s116
      %s134 = sphi 0, %s134
      %s136 = sphi 0, %s134
      %s137 = sphi 0, %s136
      %s151 = sphi 0, %s137
      %s155 = sphi 0, %s155
      %s157 = sphi 0, %s155
      %s158 = sphi 0, %s157
      %s172 = sphi 0, %s158
      %s178 = sphi 0, %s180
      %s181 = sphi 0, %s178
      %s182 = sphi 0, %s181
      %s198 = sphi 0, %s182
    $region4: #{tpu_custom_call.1} parent=1 // loop_header_branch
      %19 = sbr.rel (%p17) target = $region8
    $region5: #{tpu_custom_call.1} parent=1 // loop_body
      %s21 = ssub.s32 %s16, 1
      %s22 = ssub.s32 %s16, 2
      %s23 = sadd.s32 %s16, 1
      %s24 = ssub.s32 %s16, %s23
      %p25 = scmp.eq.s32.totalorder %s24, 0
      %s27 = sadd.s32 %s26, 1
      %s28 = scalar_select %p25, %s26, %s27
      %p31 = pneg %p25
      %p32 = scmp.eq.s32.totalorder %s16, 1
      %p33 = por %p31, %p32
      %p34 = scmp.ne.s32.totalorder %s26, %s29
      %p35 = scmp.eq.s32.totalorder %s16, 0
      %p36 = por %p34, %p35
      %p37 = scmp.ne.s32.totalorder %s26, %s29
      %p38 = scmp.eq.s32.totalorder %s21, 1
      %p39 = por %p37, %p38
      %p40 = scmp.ne.s32.totalorder %s29, %s30
      %p41 = scmp.eq.s32.totalorder %s21, 0
      %p42 = por %p40, %p41
      %p43 = scmp.ne.s32.totalorder %s29, %s30
      %p44 = scmp.eq.s32.totalorder %s22, 1
      %p45 = por %p43, %p44
      %p47 = scmp.ne.s32.totalorder %s30, %s46
      %p48 = scmp.eq.s32.totalorder %s22, 0
      %p49 = por %p47, %p48
      %s51 = sadd.s32 %s50, 1
      %p54 = scmp.eq.s32.totalorder %s16, 1
      %p55 = scmp.ne.s32.totalorder %s50, %s52
      %p56 = scmp.eq.s32.totalorder %s16, 0
      %p57 = por %p55, %p56
      %p58 = scmp.ne.s32.totalorder %s50, %s52
      %p59 = scmp.eq.s32.totalorder %s21, 1
      %p60 = por %p58, %p59
      %p61 = scmp.ne.s32.totalorder %s52, %s53
      %p62 = scmp.eq.s32.totalorder %s21, 0
      %p63 = por %p61, %p62
      %p64 = scmp.ne.s32.totalorder %s52, %s53
      %p65 = scmp.eq.s32.totalorder %s22, 1
      %p66 = por %p64, %p65
      %p68 = scmp.ne.s32.totalorder %s53, %s67
      %p69 = scmp.eq.s32.totalorder %s22, 0
      %p70 = por %p68, %p69
      %s72 = sadd.s32 %s71, 1
      %p75 = scmp.eq.s32.totalorder %s16, 1
      %p76 = scmp.ne.s32.totalorder %s71, %s73
      %p77 = scmp.eq.s32.totalorder %s16, 0
      %p78 = por %p76, %p77
      %p79 = scmp.ne.s32.totalorder %s71, %s73
      %p80 = scmp.eq.s32.totalorder %s21, 1
      %p81 = por %p79, %p80
      %p82 = scmp.ne.s32.totalorder %s73, %s74
      %p83 = scmp.eq.s32.totalorder %s21, 0
      %p84 = por %p82, %p83
      %p85 = scmp.ne.s32.totalorder %s73, %s74
      %p86 = scmp.eq.s32.totalorder %s22, 1
      %p87 = por %p85, %p86
      %p89 = scmp.ne.s32.totalorder %s74, %s88
      %p90 = scmp.eq.s32.totalorder %s22, 0
      %p91 = por %p89, %p90
      %s93 = sadd.s32 %s92, 1
      %p96 = scmp.eq.s32.totalorder %s16, 1
      %p97 = scmp.ne.s32.totalorder %s92, %s94
      %p98 = scmp.eq.s32.totalorder %s16, 0
      %p99 = por %p97, %p98
      %p100 = scmp.ne.s32.totalorder %s92, %s94
      %p101 = scmp.eq.s32.totalorder %s21, 1
      %p102 = por %p100, %p101
      %p103 = scmp.ne.s32.totalorder %s94, %s95
      %p104 = scmp.eq.s32.totalorder %s21, 0
      %p105 = por %p103, %p104
      %p106 = scmp.ne.s32.totalorder %s94, %s95
      %p107 = scmp.eq.s32.totalorder %s22, 1
      %p108 = por %p106, %p107
      %p110 = scmp.ne.s32.totalorder %s95, %s109
      %p111 = scmp.eq.s32.totalorder %s22, 0
      %p112 = por %p110, %p111
      %s114 = sadd.s32 %s113, 1
      %p117 = scmp.eq.s32.totalorder %s16, 1
      %p118 = scmp.ne.s32.totalorder %s113, %s115
      %p119 = scmp.eq.s32.totalorder %s16, 0
      %p120 = por %p118, %p119
      %p121 = scmp.ne.s32.totalorder %s113, %s115
      %p122 = scmp.eq.s32.totalorder %s21, 1
      %p123 = por %p121, %p122
      %p124 = scmp.ne.s32.totalorder %s115, %s116
      %p125 = scmp.eq.s32.totalorder %s21, 0
      %p126 = por %p124, %p125
      %p127 = scmp.ne.s32.totalorder %s115, %s116
      %p128 = scmp.eq.s32.totalorder %s22, 1
      %p129 = por %p127, %p128
      %p131 = scmp.ne.s32.totalorder %s116, %s130
      %p132 = scmp.eq.s32.totalorder %s22, 0
      %p133 = por %p131, %p132
      %s135 = sadd.s32 %s134, 1
      %p138 = scmp.eq.s32.totalorder %s16, 1
      %p139 = scmp.ne.s32.totalorder %s134, %s136
      %p140 = scmp.eq.s32.totalorder %s16, 0
      %p141 = por %p139, %p140
      %p142 = scmp.ne.s32.totalorder %s134, %s136
      %p143 = scmp.eq.s32.totalorder %s21, 1
      %p144 = por %p142, %p143
      %p145 = scmp.ne.s32.totalorder %s136, %s137
      %p146 = scmp.eq.s32.totalorder %s21, 0
      %p147 = por %p145, %p146
      %p148 = scmp.ne.s32.totalorder %s136, %s137
      %p149 = scmp.eq.s32.totalorder %s22, 1
      %p150 = por %p148, %p149
      %p152 = scmp.ne.s32.totalorder %s137, %s151
      %p153 = scmp.eq.s32.totalorder %s22, 0
      %p154 = por %p152, %p153
      %s156 = sadd.s32 %s155, 1
      %p159 = scmp.eq.s32.totalorder %s16, 1
      %p160 = scmp.ne.s32.totalorder %s155, %s157
      %p161 = scmp.eq.s32.totalorder %s16, 0
      %p162 = por %p160, %p161
      %p163 = scmp.ne.s32.totalorder %s155, %s157
      %p164 = scmp.eq.s32.totalorder %s21, 1
      %p165 = por %p163, %p164
      %p166 = scmp.ne.s32.totalorder %s157, %s158
      %p167 = scmp.eq.s32.totalorder %s21, 0
      %p168 = por %p166, %p167
      %p169 = scmp.ne.s32.totalorder %s157, %s158
      %p170 = scmp.eq.s32.totalorder %s22, 1
      %p171 = por %p169, %p170
      %p173 = scmp.ne.s32.totalorder %s158, %s172
      %p174 = scmp.eq.s32.totalorder %s22, 0
      %p175 = por %p173, %p174
      %s176 = ssub.s32 %s16, %s23
      %p177 = scmp.eq.s32.totalorder %s176, 0
      %s179 = sadd.s32 %s178, 1
      %s180 = scalar_select %p177, %s178, %s179
      %p183 = pneg %p177
      %p184 = scmp.eq.s32.totalorder %s16, 1
      %p185 = por %p183, %p184
      %p186 = scmp.ne.s32.totalorder %s178, %s181
      %p187 = scmp.eq.s32.totalorder %s16, 0
      %p188 = por %p186, %p187
      %p189 = scmp.ne.s32.totalorder %s178, %s181
      %p190 = scmp.eq.s32.totalorder %s21, 1
      %p191 = por %p189, %p190
      %p192 = scmp.ne.s32.totalorder %s181, %s182
      %p193 = scmp.eq.s32.totalorder %s21, 0
      %p194 = por %p192, %p193
      %p195 = scmp.ne.s32.totalorder %s181, %s182
      %p196 = scmp.eq.s32.totalorder %s22, 1
      %p197 = por %p195, %p196
      %p199 = scmp.ne.s32.totalorder %s182, %s198
      %p200 = scmp.eq.s32.totalorder %s22, 0
      %p201 = por %p199, %p200
      %p202 = scmp.le.s32.totalorder 1, %s16
      %p203 = scmp.lt.s32.totalorder %s16, 3
      %p204 = pnand %p202, %p203
      %p205 = pneg %p204
      // Predicated region
      $region9: #{tpu_custom_call.1} parent=5 // pred_check
        _
      $region10: #{tpu_custom_call.1} parent=5 // pred_check_branch
        %207 = sbr.rel (%p204) target = $region12
      $region11: #{tpu_custom_call.1} parent=5 // pred_region
        %s208 = ssub.s32 %s16, 1
        // Predicated region
        $region13: #{tpu_custom_call.1} parent=11 // pred_check
          %p209 = pneg %p63
        $region14: #{tpu_custom_call.1} parent=11 // pred_check_branch
          %211 = sbr.rel (%p209) target = $region16
        $region15: #{tpu_custom_call.1} parent=11 // pred_region
          _
        $region16: #{tpu_custom_call.1} parent=11 // pred_fallthru
          _
        // Predicated region
        $region17: #{tpu_custom_call.1} parent=11 // pred_check
          %p212 = pneg %p84
        $region18: #{tpu_custom_call.1} parent=11 // pred_check_branch
          %214 = sbr.rel (%p212) target = $region20
        $region19: #{tpu_custom_call.1} parent=11 // pred_region
          _
        $region20: #{tpu_custom_call.1} parent=11 // pred_fallthru
          _
        // Predicated region
        $region21: #{tpu_custom_call.1} parent=11 // pred_check
          %p215 = pneg %p105
        $region22: #{tpu_custom_call.1} parent=11 // pred_check_branch
          %217 = sbr.rel (%p215) target = $region24
        $region23: #{tpu_custom_call.1} parent=11 // pred_region
          _
        $region24: #{tpu_custom_call.1} parent=11 // pred_fallthru
          _
        // Predicated region
        $region25: #{tpu_custom_call.1} parent=11 // pred_check
          %p218 = pneg %p126
        $region26: #{tpu_custom_call.1} parent=11 // pred_check_branch
          %220 = sbr.rel (%p218) target = $region28
        $region27: #{tpu_custom_call.1} parent=11 // pred_region
          _
        $region28: #{tpu_custom_call.1} parent=11 // pred_fallthru
          _
        // Predicated region
        $region29: #{tpu_custom_call.1} parent=11 // pred_check
          %p221 = pneg %p147
        $region30: #{tpu_custom_call.1} parent=11 // pred_check_branch
          %223 = sbr.rel (%p221) target = $region32
        $region31: #{tpu_custom_call.1} parent=11 // pred_region
          _
        $region32: #{tpu_custom_call.1} parent=11 // pred_fallthru
          _
        // Predicated region
        $region33: #{tpu_custom_call.1} parent=11 // pred_check
          %p224 = pneg %p168
        $region34: #{tpu_custom_call.1} parent=11 // pred_check_branch
          %226 = sbr.rel (%p224) target = $region36
        $region35: #{tpu_custom_call.1} parent=11 // pred_region
          _
        $region36: #{tpu_custom_call.1} parent=11 // pred_fallthru
          _
      $region12: #{tpu_custom_call.1} parent=5 // pred_fallthru
        _
      %p227 = scmp.lt.s32.totalorder %s16, 2
      // Predicated region
      $region37: #{tpu_custom_call.1} parent=5 // pred_check
        %p228 = pneg %p227
      $region38: #{tpu_custom_call.1} parent=5 // pred_check_branch
        %230 = sbr.rel (%p228) target = $region40
      $region39: #{tpu_custom_call.1} parent=5 // pred_region
        // Predicated region
        $region41: #{tpu_custom_call.1} parent=39 // pred_check
          %p231 = pneg %p36
        $region42: #{tpu_custom_call.1} parent=39 // pred_check_branch
          %233 = sbr.rel (%p231) target = $region44
        $region43: #{tpu_custom_call.1} parent=39 // pred_region
          %p234 = scmp.lt.s32.totalorder %s16, 1
          %s235 = scalar_select %p234, %s16, 1
          %s236 = smul.addr %s235, 2
          %s237 = smul.addr %s236, 4
          %s238 = scalar_lea.vmem %s0, %s237
        $region44: #{tpu_custom_call.1} parent=39 // pred_fallthru
          _
      $region40: #{tpu_custom_call.1} parent=5 // pred_fallthru
        _
      %p239 = scmp.le.s32.totalorder 1, %s16
      %p240 = scmp.lt.s32.totalorder %s16, 3
      %p241 = pnand %p239, %p240
      %p242 = pneg %p241
      // Predicated region
      $region45: #{tpu_custom_call.1} parent=5 // pred_check
        _
      $region46: #{tpu_custom_call.1} parent=5 // pred_check_branch
        %244 = sbr.rel (%p241) target = $region48
      $region47: #{tpu_custom_call.1} parent=5 // pred_region
        %s245 = ssub.s32 %s16, 1
        %p246 = scmp.lt.s32.totalorder %s21, 1
        %s247 = scalar_select %p246, %s21, 1
        %s248 = smul.addr %s247, 2
        %s249 = smul.addr %s248, 4
        %s250 = scalar_lea.vmem %s0, %s249
        %p251 = pneg %p42
        %p252 = pneg %p39
        %p253 = pneg %p63
        %p254 = pneg %p60
        %p255 = pneg %p84
        %p256 = pneg %p81
        %p257 = pneg %p105
        %p258 = pneg %p102
        %p259 = pneg %p126
        %p260 = pneg %p123
        %p261 = pneg %p147
        %p262 = pneg %p144
        %p263 = pneg %p168
        %p264 = pneg %p165
        %p265 = pneg %p194
        %p266 = pneg %p191
        %s267 = sand.u32 %s181, 1
        %s268 = scalar_lea.sflag [#allocation4], %s267
        %s269 = sand.u32 %s181, 1
        %s270 = smul.addr %s269, 8
        %s271 = scalar_lea.vmem [#allocation3], %s270
        %p272 = scmp.lt.s32.totalorder %s21, 1
        %s273 = scalar_select %p272, %s21, 1
        %s274 = smul.addr %s273, 2
        %s275 = smul.addr %s274, 4
        %s276 = scalar_lea.vmem %s0, %s275
        %v278 = vld [vmem:[%s276] sm:$0xf]
        %v279 = vld [vmem:[%s276 + $0x4] sm:$0xf]
        %v280 = vld [vmem:[%s1] sm:$0x3]
        %v281 = vld [vmem:[%s2] sm:$0x1]
        %v283 = vlaneseq
        %v284 = vshrl.u32 %v283, 7
        %v285 = vsub.s32 0, %v284
        %v286 = vrot.slane %v281, %v285
        %v290 = vunpack.c.l.b16 %v278
        %v291 = vunpack.c.l.b16 %v279
        %v292 = vpack.c.b16 %v291, %v290
        %vm293 = vcmask 31744
        %v295 = vsel %vm293, %v292, 0
        %vm297 = vcmask 1041408
        %v299 = vsel %vm297, %v280, 0
        %301 = vmatprep.subr.bf16.mxu0 0
        %302 = vmatpush1.bf16.msra.mxu0 %v299
        %303 = vmatprep.subr.bf16.mxu0 0
        %304 = vmatpush1.bf16.msra.mxu0 0
        %305 = vmatprep.subr.bf16.mxu0 0
        %306 = vmatpush1.bf16.msra.mxu0 0
        %307 = vmatprep.subr.bf16.mxu0 0
        %308 = vmatpush1.bf16.msra.mxu0 0
        %309 = vmatprep.subr.bf16.mxu0 0
        %310 = vmatpush1.bf16.msra.mxu0 0
        %311 = vmatprep.subr.bf16.mxu0 0
        %312 = vmatpush1.bf16.msra.mxu0 0
        %313 = vmatprep.subr.bf16.mxu0 0
        %314 = vmatpush1.bf16.msra.mxu0 0
        %315 = vmatprep.subr.bf16.mxu0 0
        %316 = vmatpush1.bf16.msra.mxu0 0
        %317 = vmatprep.subr.bf16.mxu0 0
        %318 = vmatpush1.bf16.msra.mxu0 0
        %319 = vmatprep.subr.bf16.mxu0 0
        %320 = vmatpush1.bf16.msra.mxu0 0
        %321 = vmatprep.subr.bf16.mxu0 0
        %322 = vmatpush1.bf16.msra.mxu0 0
        %323 = vmatprep.subr.bf16.mxu0 0
        %324 = vmatpush1.bf16.msra.mxu0 0
        %325 = vmatprep.subr.bf16.mxu0 0
        %326 = vmatpush1.bf16.msra.mxu0 0
        %327 = vmatprep.subr.bf16.mxu0 0
        %328 = vmatpush1.bf16.msra.mxu0 0
        %329 = vmatprep.subr.bf16.mxu0 0
        %330 = vmatpush1.bf16.msra.mxu0 0
        %331 = vmatprep.subr.bf16.mxu0 0
        %332 = vmatpush1.bf16.msra.mxu0 0
        %333 = vmatprep.mubr.bf16.mxu0 0
        %334 = vmatmul.mubr.bf16.gmra.mrb[0].mxu0 %v295
        %v335 = vpop.f32.mrb[0].mxu0
        %v336 = vadd.f32 %v286, %v335
        %v337 = vpop.f32.mrb[0].mxu0
        %v338 = vpop.f32.mrb[0].mxu0
        %v339 = vadd.f32 %v286, %v338
        %v340 = vpop.f32.mrb[0].mxu0
        %341 = vdwg.mxu0
        %v342 = vadd.f32 %v336, 3.0
        %v343 = vadd.f32 %v339, 3.0
        %v344 = vmax.f32 %v342, 0.0
        %v345 = vmax.f32 %v343, 0.0
        %v346 = vmin.f32 %v344, 6.0
        %v347 = vmin.f32 %v345, 6.0
        %v348 = vmul.f32 %v336, %v346
        %v349 = vmul.f32 %v339, %v347
        %vm350 = vcmask 130048
        %351 = vst.msk [vmem:[#allocation2] sm:$0xff] %vm350, 0.0
        %352 = vst.msk [vmem:[#allocation2 + $0x18] sm:$0xff] %vm350, 0.0
        %353 = vst.msk [vmem:[#allocation2 + $0x8] sm:$0xff] %vm350, %v348
        %354 = vst.msk [vmem:[#allocation2 + $0x10] sm:$0xff] %vm350, %v349
        %v355 = vld [vmem:[%s3] sm:$0x7f]
        %v356 = vld [vmem:[%s4] sm:$0x1]
        %v358 = vlaneseq
        %v359 = vshrl.u32 %v358, 7
        %v360 = vsub.s32 0, %v359
        %v361 = vrot.slane %v356, %v360
        %s363 = scalar_lea.vmem [#allocation2], 5
        %v364 = vld [vmem:[%s363] ss:$2 sm:$0xff]
        %v365 = vlaneseq
        %v366 = vshrl.u32 %v365, 7
        %v367 = vsub.s32 0, %v366
        %v368 = vrot.slane %v355, %v367
        %v369 = vmul.f32 %v364, %v368
        %v370 = vadd.f32 %v361, %v369
        %s371 = scalar_lea.vmem [#allocation2], 6
        %v372 = vld [vmem:[%s371] ss:$2 sm:$0xff]
        %v373 = vlaneseq
        %v374 = vshrl.u32 %v373, 7
        %v375 = vsub.s32 1, %v374
        %v376 = vrot.slane %v355, %v375
        %v377 = vmul.f32 %v372, %v376
        %v378 = vadd.f32 %v370, %v377
        %s379 = scalar_lea.vmem [#allocation2], 7
        %v380 = vld [vmem:[%s379] ss:$2 sm:$0xff]
        %v381 = vlaneseq
        %v382 = vshrl.u32 %v381, 7
        %v383 = vsub.s32 2, %v382
        %v384 = vrot.slane %v355, %v383
        %v385 = vmul.f32 %v380, %v384
        %v386 = vadd.f32 %v378, %v385
        %s387 = scalar_lea.vmem [#allocation2], 8
        %v388 = vld [vmem:[%s387] ss:$2 sm:$0xff]
        %v389 = vlaneseq
        %v390 = vshrl.u32 %v389, 7
        %v391 = vsub.s32 3, %v390
        %v392 = vrot.slane %v355, %v391
        %v393 = vmul.f32 %v388, %v392
        %v394 = vadd.f32 %v386, %v393
        %s395 = scalar_lea.vmem [#allocation2], 9
        %v396 = vld [vmem:[%s395] ss:$2 sm:$0xff]
        %v397 = vlaneseq
        %v398 = vshrl.u32 %v397, 7
        %v399 = vsub.s32 4, %v398
        %v400 = vrot.slane %v355, %v399
        %v401 = vmul.f32 %v396, %v400
        %v402 = vadd.f32 %v394, %v401
        %s403 = scalar_lea.vmem [#allocation2], 10
        %v404 = vld [vmem:[%s403] ss:$2 sm:$0xff]
        %v405 = vlaneseq
        %v406 = vshrl.u32 %v405, 7
        %v407 = vsub.s32 5, %v406
        %v408 = vrot.slane %v355, %v407
        %v409 = vmul.f32 %v404, %v408
        %v410 = vadd.f32 %v402, %v409
        %s411 = scalar_lea.vmem [#allocation2], 11
        %v412 = vld [vmem:[%s411] ss:$2 sm:$0xff]
        %v413 = vlaneseq
        %v414 = vshrl.u32 %v413, 7
        %v415 = vsub.s32 6, %v414
        %v416 = vrot.slane %v355, %v415
        %v417 = vmul.f32 %v412, %v416
        %v418 = vadd.f32 %v410, %v417
        %v419 = vadd.f32 %v418, 3.0
        %v420 = vmax.f32 %v419, 0.0
        %v421 = vmin.f32 %v420, 6.0
        %v422 = vmul.f32 %v418, %v421
        %v423 = vpack.c.bf16 %v422, %v422
        %v424 = vld [vmem:[%s5] sm:$0xf]
        %v425 = vld [vmem:[%s5 + $0x4] sm:$0xf]
        %v426 = vld [vmem:[%s6] sm:$0x1]
        %v428 = vlaneseq
        %v429 = vshrl.u32 %v428, 7
        %v430 = vsub.s32 0, %v429
        %v431 = vrot.slane %v426, %v430
        %v435 = vunpack.c.l.b16 %v424
        %v436 = vunpack.c.l.b16 %v425
        %v437 = vpack.c.b16 %v436, %v435
        %v440 = vsel %vm350, %v423, 0
        %442 = vmatprep.subr.bf16.mxu0 0
        %443 = vmatpush1.bf16.msra.mxu0 %v437
        %444 = vmatprep.subr.bf16.mxu0 0
        %445 = vmatpush1.bf16.msra.mxu0 0
        %446 = vmatprep.subr.bf16.mxu0 0
        %447 = vmatpush1.bf16.msra.mxu0 0
        %448 = vmatprep.subr.bf16.mxu0 0
        %449 = vmatpush1.bf16.msra.mxu0 0
        %450 = vmatprep.subr.bf16.mxu0 0
        %451 = vmatpush1.bf16.msra.mxu0 0
        %452 = vmatprep.subr.bf16.mxu0 0
        %453 = vmatpush1.bf16.msra.mxu0 0
        %454 = vmatprep.subr.bf16.mxu0 0
        %455 = vmatpush1.bf16.msra.mxu0 0
        %456 = vmatprep.subr.bf16.mxu0 0
        %457 = vmatpush1.bf16.msra.mxu0 0
        %458 = vmatprep.subr.bf16.mxu0 0
        %459 = vmatpush1.bf16.msra.mxu0 0
        %460 = vmatprep.subr.bf16.mxu0 0
        %461 = vmatpush1.bf16.msra.mxu0 0
        %462 = vmatprep.subr.bf16.mxu0 0
        %463 = vmatpush1.bf16.msra.mxu0 0
        %464 = vmatprep.subr.bf16.mxu0 0
        %465 = vmatpush1.bf16.msra.mxu0 0
        %466 = vmatprep.subr.bf16.mxu0 0
        %467 = vmatpush1.bf16.msra.mxu0 0
        %468 = vmatprep.subr.bf16.mxu0 0
        %469 = vmatpush1.bf16.msra.mxu0 0
        %470 = vmatprep.subr.bf16.mxu0 0
        %471 = vmatpush1.bf16.msra.mxu0 0
        %472 = vmatprep.subr.bf16.mxu0 0
        %473 = vmatpush1.bf16.msra.mxu0 0
        %474 = vmatprep.mubr.bf16.mxu0 0
        %475 = vmatmul.mubr.bf16.gmra.mrb[0].mxu0 %v440
        %v476 = vpop.f32.mrb[0].mxu0
        %v477 = vadd.f32 %v431, %v476
        %v478 = vpop.f32.mrb[0].mxu0
        %v479 = vpop.f32.mrb[0].mxu0
        %v480 = vpop.f32.mrb[0].mxu0
        %481 = vdwg.mxu0
        %vm482 = vcmask 64512
        %483 = vst.msk [vmem:[%s271] sm:$0xff] %vm482, %v477
        %s484 = sand.u32 %s181, 1
        %s485 = scalar_lea.sflag [#allocation4], %s484
        %s486 = sand.u32 %s181, 1
        %s487 = smul.addr %s486, 8
        %s488 = scalar_lea.vmem [#allocation3], %s487
        // Predicated region
        $region49: #{tpu_custom_call.1} parent=47 // pred_check
          %p489 = pneg %p191
        $region50: #{tpu_custom_call.1} parent=47 // pred_check_branch
          %491 = sbr.rel (%p489) target = $region52
        $region51: #{tpu_custom_call.1} parent=47 // pred_region
          %s493 = ssub.s32 128, 128
          %494 = vsyncadd %s485, %s493
          %s495 = smul.addr %s21, 128
          %s496 = scalar_lea.hbm %s7, %s495
          %s498 = sshll.u32 %s488, 4
          %s499 = int_to_ptr.vmem [resolvable:$true] %s498
          %501 = dma.vmem_to_hbm [thread:$0]  %s499, 128, %s496, %s485
        $region52: #{tpu_custom_call.1} parent=47 // pred_fallthru
          _
      $region48: #{tpu_custom_call.1} parent=5 // pred_fallthru
        _
      %p502 = scmp.le.s32.totalorder 2, %s16
      // Predicated region
      $region53: #{tpu_custom_call.1} parent=5 // pred_check
        %p503 = pneg %p502
      $region54: #{tpu_custom_call.1} parent=5 // pred_check_branch
        %505 = sbr.rel (%p503) target = $region56
      $region55: #{tpu_custom_call.1} parent=5 // pred_region
        %s506 = ssub.s32 %s16, 2
        // Predicated region
        $region57: #{tpu_custom_call.1} parent=55 // pred_check
          %p507 = pneg %p197
        $region58: #{tpu_custom_call.1} parent=55 // pred_check_branch
          %509 = sbr.rel (%p507) target = $region60
        $region59: #{tpu_custom_call.1} parent=55 // pred_region
          %s510 = sand.u32 %s182, 1
          %s511 = scalar_lea.sflag [#allocation4], %s510
          %s512 = sand.u32 %s182, 1
          %s513 = smul.addr %s512, 8
          %s514 = scalar_lea.vmem [#allocation3], %s513
          %515 = dma.done %s511, 128
        $region60: #{tpu_custom_call.1} parent=55 // pred_fallthru
          _
      $region56: #{tpu_custom_call.1} parent=5 // pred_fallthru
        _
    $region6: #{tpu_custom_call.1} parent=1 // loop_footer
      %s20 = sadd.s32 1, %s16
    $region7: #{tpu_custom_call.1} parent=1 // loop_footer_branch
      %15 = sbr.rel target = $region3
    $region8: #{tpu_custom_call.1} parent=1 // loop_exit
      _
    %516 = vsyncpa [#allocation4], 1
    %s517 = scalar_lea.sflag [#allocation4], 1
    %518 = vsyncpa %s517, 1

</llo_original>
